<compile_context>
chip_gen: v6e
topology: v6e:2x2x1
jax: 0.10.0
libtpu: 0.0.40
codegen_flags: <defaults>
</compile_context>

<pallas_src>
import functools

import jax
import jax.numpy as jnp
import numpy as np
from jax.experimental import pallas as pl
from jax.experimental.pallas import tpu as pltpu

LANE = 128


# ----------------------------- Pallas kernel --------------------------------

def _fused_head_kernel(segments, x0_ref, x1_ref, xl_ref, w_ref, b_ref, o_ref):
    """Fused pool + concat + packed projection + per-task softmax.

    x0_ref : (N, C0, S0)  pathway 0, spatial dims flattened
    x1_ref : (N, C1, S1)  pathway 1, spatial dims flattened
    xl_ref : (N, D1)      last input (x1 in the torch module)
    w_ref  : (C0+C1+D1, n_pad)  packed [W_all ; fuse*W1_all], zero-padded cols
    b_ref  : (1, n_pad)         packed b_all + fuse*b1_all,   zero-padded cols
    o_ref  : (N, n_pad)         lane-dense output slab
    segments : static tuple of (offset, n_classes) per task
    """
    # Global average pool (AdaptiveAvgPool3d((1,1,1))), f32 accumulation.
    p0 = jnp.mean(x0_ref[...].astype(jnp.float32), axis=-1)            # (N, C0)
    p1 = jnp.mean(x1_ref[...].astype(jnp.float32), axis=-1)            # (N, C1)

    # Single combined LHS and ONE MXU matmul for every task head.
    lhs = jnp.concatenate(
        [p0, p1, xl_ref[...].astype(jnp.float32)], axis=-1)            # (N, D)
    logits = (jnp.dot(lhs, w_ref[...], preferred_element_type=jnp.float32)
              + b_ref[...])                                            # (N, n_pad)

    # Per-task (segmented) softmax via masks — full-lane-width vector ops only.
    col = jax.lax.broadcasted_iota(jnp.int32, logits.shape, 1)
    out = jnp.zeros_like(logits)
    for off, n in segments:                                            # static unroll
        mask = (col >= off) & (col < off + n)
        m = jnp.max(jnp.where(mask, logits, -jnp.inf), axis=-1, keepdims=True)
        e = jnp.where(mask, jnp.exp(logits - m), 0.0)
        denom = jnp.sum(e, axis=-1, keepdims=True)
        r = pl.reciprocal(denom, approx=True)       # EUP slot
        r = r * (2.0 - denom * r)                   # one Newton step -> f32 accuracy
        out = out + e * r
    o_ref[...] = out.astype(o_ref.dtype)


# ------------------------------ JAX wrapper ----------------------------------

def multi_task_perceiver_head_forward(params, inputs, num_pathways, num_classes):
    """Eval-mode forward. inputs = [pathway0, ..., pathway{P-1}, x1]."""
    assert num_pathways == 2, "kernel specialized for 2 pooled pathways"
    xl = inputs[-1]                                               # (N, D1)
    N = xl.shape[0]

    # Flatten spatial dims: (N, C, T, H, W) -> (N, C, S).
    flat = [inputs[p].reshape(inputs[p].shape[0], inputs[p].shape[1], -1)
            for p in range(num_pathways)]

    # Pack all task heads along the class axis and fold `fuse` into the x1
    # branch (tiny jnp ops, fused by XLA; run once per forward).
    fuse = params["fuse"][0, 0]
    w_top = jnp.concatenate([w for (w, _) in params["proj"]], axis=1)   # (D0, n_tot)
    b_top = jnp.concatenate([b for (_, b) in params["proj"]], axis=1)   # (1, n_tot)
    w_bot = jnp.concatenate([w for (w, _) in params["proj1"]], axis=1)  # (D1, n_tot)
    b_bot = jnp.concatenate([b for (_, b) in params["proj1"]], axis=1)  # (1, n_tot)
    w_all = jnp.concatenate([w_top, fuse * w_bot], axis=0)              # (D0+D1, n_tot)
    b_all = b_top + fuse * b_bot                                        # (1, n_tot)

    n_tot = int(sum(num_classes))
    n_pad = ((n_tot + LANE - 1) // LANE) * LANE                         # lane-dense
    w_all = jnp.pad(w_all, ((0, 0), (0, n_pad - n_tot)))
    b_all = jnp.pad(b_all, ((0, 0), (0, n_pad - n_tot)))

    segments = []
    off = 0
    for n in num_classes:
        segments.append((off, int(n)))
        off += int(n)
    segments = tuple(segments)

    out = pl.pallas_call(
        functools.partial(_fused_head_kernel, segments),
        out_shape=jax.ShapeDtypeStruct((N, n_pad), jnp.float32),
        in_specs=[pl.BlockSpec(memory_space=pltpu.MemorySpace.VMEM)] * 5,
        out_specs=pl.BlockSpec(memory_space=pltpu.MemorySpace.VMEM),
    )(flat[0], flat[1], xl, w_all, b_all)

    # Per-task slices of the lane-dense slab (cheap XLA slices).
    return [out[:, o:o + n] for (o, n) in segments]


def init_params(key, dim_in, num_classes, num_pathways):
    """Deterministic init mimicking nn.Linear default (uniform +/- 1/sqrt(fan_in))."""
    d0 = sum(dim_in[:num_pathways])
    d1 = sum(dim_in[num_pathways:])
    params = {"fuse": jnp.full((1, 1), 0.01, jnp.float32), "proj": [], "proj1": []}
    for n in num_classes:
        key, k1, k2, k3, k4 = jax.random.split(key, 5)
        s0 = 1.0 / np.sqrt(d0)
        s1 = 1.0 / np.sqrt(d1)
        params["proj"].append((
            jax.random.uniform(k1, (d0, n), jnp.float32, -s0, s0),
            jax.random.uniform(k2, (1, n), jnp.float32, -s0, s0),
        ))
        params["proj1"].append((
            jax.random.uniform(k3, (d1, n), jnp.float32, -s1, s1),
            jax.random.uniform(k4, (1, n), jnp.float32, -s1, s1),
        ))
    return params


# ------------------------------ reference ------------------------------------

def reference_forward(params, inputs, num_pathways):
    pooled = [jnp.mean(inputs[p], axis=(2, 3, 4)) for p in range(num_pathways)]
    feat = jnp.concatenate(pooled, axis=1)
    x1 = inputs[-1]
    fuse = params["fuse"][0, 0]
    outs = []
    for (w, b), (w1, b1) in zip(params["proj"], params["proj1"]):
        logits = feat @ w + b + fuse * (x1 @ w1 + b1)
        outs.append(jax.nn.softmax(logits, axis=-1))
    return outs


# --------------------------------- main ---------------------------------------

if __name__ == "__main__":
    N = 2
    dim_in = (32, 16, 24)          # len == 3, as asserted in the module
    num_classes = (5, 3)           # two task heads
    num_pathways = 2               # len(pool_size); pool_size = [None, None]

    key = jax.random.PRNGKey(0)
    key, kp, k0, k1, k2 = jax.random.split(key, 5)
    params = init_params(kp, dim_in, num_classes, num_pathways)

    path0 = jax.random.normal(k0, (N, dim_in[0], 2, 4, 4), jnp.float32)  # NCTHW
    path1 = jax.random.normal(k1, (N, dim_in[1], 4, 4, 4), jnp.float32)  # NCTHW
    x1 = jax.random.normal(k2, (N, dim_in[2]), jnp.float32)              # (N, C)
    inputs = [path0, path1, x1]

    outs = multi_task_perceiver_head_forward(params, inputs, num_pathways, num_classes)
    outs = [jax.block_until_ready(o) for o in outs]

    refs = reference_forward(params, inputs, num_pathways)
    for o, r, n in zip(outs, refs, num_classes):
        assert o.shape == (N, n), o.shape
        np.testing.assert_allclose(np.asarray(o), np.asarray(r), rtol=1e-5, atol=1e-5)

    print("KERNEL_OK")
</pallas_src>

<mosaic_0001>
module attributes {stable_mosaic.version = 11 : i64} {
  func.func @_fused_head_kernel(%arg0: memref<2x32x32xf32, #tpu.memory_space<vmem>>, %arg1: memref<2x16x64xf32, #tpu.memory_space<vmem>>, %arg2: memref<2x24xf32, #tpu.memory_space<vmem>>, %arg3: memref<72x128xf32, #tpu.memory_space<vmem>>, %arg4: memref<1x128xf32, #tpu.memory_space<vmem>>, %arg5: memref<2x128xf32, #tpu.memory_space<vmem>>) attributes {dimension_semantics = [], scalar_prefetch = 0 : i64, scratch_operands = 0 : i64, tpu.core_type = #tpu.core_type<tc>} {
    %c0 = arith.constant 0 : index
    %c0_0 = arith.constant 0 : index
    %c0_1 = arith.constant 0 : index
    %0 = vector.load %arg0[%c0, %c0_0, %c0_1] : memref<2x32x32xf32, #tpu.memory_space<vmem>>, vector<2x32x32xf32>
    %cst = arith.constant dense<0.000000e+00> : vector<2x32xf32>
    %1 = vector.multi_reduction <add>, %0, %cst [2] : vector<2x32x32xf32> to vector<2x32xf32>
    %cst_2 = arith.constant 3.200000e+01 : f32
    %2 = vector.broadcast %cst_2 : f32 to vector<2x32xf32>
    %3 = arith.divf %1, %2 : vector<2x32xf32>
    %c0_3 = arith.constant 0 : index
    %c0_4 = arith.constant 0 : index
    %c0_5 = arith.constant 0 : index
    %4 = vector.load %arg1[%c0_3, %c0_4, %c0_5] : memref<2x16x64xf32, #tpu.memory_space<vmem>>, vector<2x16x64xf32>
    %cst_6 = arith.constant dense<0.000000e+00> : vector<2x16xf32>
    %5 = vector.multi_reduction <add>, %4, %cst_6 [2] : vector<2x16x64xf32> to vector<2x16xf32>
    %cst_7 = arith.constant 6.400000e+01 : f32
    %6 = vector.broadcast %cst_7 : f32 to vector<2x16xf32>
    %7 = arith.divf %5, %6 : vector<2x16xf32>
    %c0_8 = arith.constant 0 : index
    %c0_9 = arith.constant 0 : index
    %8 = vector.load %arg2[%c0_8, %c0_9] : memref<2x24xf32, #tpu.memory_space<vmem>>, vector<2x24xf32>
    %9 = tpu.concatenate %3, %7, %8 in 1 : vector<2x32xf32>, vector<2x16xf32>, vector<2x24xf32> -> vector<2x72xf32>
    %c0_10 = arith.constant 0 : index
    %c0_11 = arith.constant 0 : index
    %10 = vector.load %arg3[%c0_10, %c0_11] : memref<72x128xf32, #tpu.memory_space<vmem>>, vector<72x128xf32>
    %cst_12 = arith.constant dense<0.000000e+00> : vector<2x128xf32>
    %11 = tpu.matmul %9, %10, %cst_12 {dimension_numbers = #tpu.dot_dimension_numbers<[1], [0], [0], [1], [0, 0, 1, 1], [], []>} : vector<2x72xf32>, vector<72x128xf32>, vector<2x128xf32> -> vector<2x128xf32>
    %c0_13 = arith.constant 0 : index
    %c0_14 = arith.constant 0 : index
    %12 = vector.load %arg4[%c0_13, %c0_14] : memref<1x128xf32, #tpu.memory_space<vmem>>, vector<1x128xf32>
    %13 = vector.broadcast %12 : vector<1x128xf32> to vector<2x128xf32>
    %14 = arith.addf %11, %13 : vector<2x128xf32>
    %15 = tpu.iota {dimensions = array<i32: 1>} : vector<2x128xi32>
    %cst_15 = arith.constant 0.000000e+00 : f32
    %16 = vector.broadcast %cst_15 : f32 to vector<2x128xf32>
    %c0_i32 = arith.constant 0 : i32
    %17 = vector.broadcast %c0_i32 : i32 to vector<2x128xi32>
    %18 = arith.cmpi sge, %15, %17 : vector<2x128xi32>
    %c5_i32 = arith.constant 5 : i32
    %19 = vector.broadcast %c5_i32 : i32 to vector<2x128xi32>
    %20 = arith.cmpi slt, %15, %19 : vector<2x128xi32>
    %21 = arith.andi %18, %20 : vector<2x128xi1>
    %cst_16 = arith.constant 0xFF800000 : f32
    %22 = vector.broadcast %cst_16 : f32 to vector<2x128xf32>
    %23 = arith.select %21, %14, %22 : vector<2x128xi1>, vector<2x128xf32>
    %cst_17 = arith.constant dense<0xFF800000> : vector<2xf32>
    %24 = vector.multi_reduction <maximumf>, %23, %cst_17 [1] : vector<2x128xf32> to vector<2xf32>
    %25 = vector.shape_cast %24 : vector<2xf32> to vector<2x1xf32>
    %26 = vector.broadcast %25 : vector<2x1xf32> to vector<2x128xf32>
    %27 = arith.subf %14, %26 : vector<2x128xf32>
    %28 = math.exp %27 : vector<2x128xf32>
    %cst_18 = arith.constant 0.000000e+00 : f32
    %29 = vector.broadcast %cst_18 : f32 to vector<2x128xf32>
    %30 = arith.select %21, %28, %29 : vector<2x128xi1>, vector<2x128xf32>
    %cst_19 = arith.constant dense<0.000000e+00> : vector<2xf32>
    %31 = vector.multi_reduction <add>, %30, %cst_19 [1] : vector<2x128xf32> to vector<2xf32>
    %32 = vector.shape_cast %31 : vector<2xf32> to vector<2x1xf32>
    %33 = tpu.reciprocal %32 {approx = true} : vector<2x1xf32> -> vector<2x1xf32>
    %34 = arith.mulf %32, %33 : vector<2x1xf32>
    %cst_20 = arith.constant 2.000000e+00 : f32
    %35 = vector.broadcast %cst_20 : f32 to vector<2x1xf32>
    %36 = arith.subf %35, %34 : vector<2x1xf32>
    %37 = arith.mulf %33, %36 : vector<2x1xf32>
    %38 = vector.broadcast %37 : vector<2x1xf32> to vector<2x128xf32>
    %39 = arith.mulf %30, %38 : vector<2x128xf32>
    %40 = arith.addf %16, %39 : vector<2x128xf32>
    %c5_i32_21 = arith.constant 5 : i32
    %41 = vector.broadcast %c5_i32_21 : i32 to vector<2x128xi32>
    %42 = arith.cmpi sge, %15, %41 : vector<2x128xi32>
    %c8_i32 = arith.constant 8 : i32
    %43 = vector.broadcast %c8_i32 : i32 to vector<2x128xi32>
    %44 = arith.cmpi slt, %15, %43 : vector<2x128xi32>
    %45 = arith.andi %42, %44 : vector<2x128xi1>
    %cst_22 = arith.constant 0xFF800000 : f32
    %46 = vector.broadcast %cst_22 : f32 to vector<2x128xf32>
    %47 = arith.select %45, %14, %46 : vector<2x128xi1>, vector<2x128xf32>
    %cst_23 = arith.constant dense<0xFF800000> : vector<2xf32>
    %48 = vector.multi_reduction <maximumf>, %47, %cst_23 [1] : vector<2x128xf32> to vector<2xf32>
    %49 = vector.shape_cast %48 : vector<2xf32> to vector<2x1xf32>
    %50 = vector.broadcast %49 : vector<2x1xf32> to vector<2x128xf32>
    %51 = arith.subf %14, %50 : vector<2x128xf32>
    %52 = math.exp %51 : vector<2x128xf32>
    %cst_24 = arith.constant 0.000000e+00 : f32
    %53 = vector.broadcast %cst_24 : f32 to vector<2x128xf32>
    %54 = arith.select %45, %52, %53 : vector<2x128xi1>, vector<2x128xf32>
    %cst_25 = arith.constant dense<0.000000e+00> : vector<2xf32>
    %55 = vector.multi_reduction <add>, %54, %cst_25 [1] : vector<2x128xf32> to vector<2xf32>
    %56 = vector.shape_cast %55 : vector<2xf32> to vector<2x1xf32>
    %57 = tpu.reciprocal %56 {approx = true} : vector<2x1xf32> -> vector<2x1xf32>
    %58 = arith.mulf %56, %57 : vector<2x1xf32>
    %cst_26 = arith.constant 2.000000e+00 : f32
    %59 = vector.broadcast %cst_26 : f32 to vector<2x1xf32>
    %60 = arith.subf %59, %58 : vector<2x1xf32>
    %61 = arith.mulf %57, %60 : vector<2x1xf32>
    %62 = vector.broadcast %61 : vector<2x1xf32> to vector<2x128xf32>
    %63 = arith.mulf %54, %62 : vector<2x128xf32>
    %64 = arith.addf %40, %63 : vector<2x128xf32>
    %c0_27 = arith.constant 0 : index
    %c0_28 = arith.constant 0 : index
    %65 = vector.load %arg5[%c0_27, %c0_28] : memref<2x128xf32, #tpu.memory_space<vmem>>, vector<2x128xf32>
    tpu.vector_store %arg5[%c0_27, %c0_28], %64 {strides = array<i32>} : memref<2x128xf32, #tpu.memory_space<vmem>>, vector<2x128xf32>,
    return
  }
}

</mosaic_0001>

<llo_original>
// kernel: tpu_custom_call.1
$region0: #{tpu_custom_call.1}
  #allocation0 [shape = 'u32[]', space=smem, size = 0x4, offset = 0x4, fixed_abs, tag = 'smem constant byte address 0x4 - core index']
  #allocation1 [shape = 'u32[144,128]{1,0:T(1,128)}', space=vmem, size = 0x12000, scoped, tag = 'internal scratch']
  %s0 = inlined_call_operand.hbm [shape: f32[2,32,32], index: 0, kind: input, shape index: {}]
  %s1 = inlined_call_operand.hbm [shape: f32[2,16,64], index: 1, kind: input, shape index: {}]
  %s2 = inlined_call_operand.vmem [shape: f32[2,24], index: 2, kind: input, shape index: {}]
  %s3 = inlined_call_operand.hbm [shape: f32[72,128], index: 3, kind: input, shape index: {}]
  %s4 = inlined_call_operand.vmem [shape: f32[1,128], index: 4, kind: input, shape index: {}]
  %s5 = inlined_call_operand.hbm [shape: f32[2,128], index: 5, kind: output, shape index: {}]
  %s6 = sld [smem:[#allocation0]]
  $region42: #{tpu_custom_call.1} parent=0
    _
  %s8 = ssub.s32 1, %s6
  %s9 = scalar_select 0, %s8, %s6
  $region1: #{tpu_custom_call.1} parent=0
    #allocation2 [shape = 'u8[32768]{0}', space=vmem, size = 0x8000, scoped, tag = 'input window, operand 0, single buffered']
    #allocation3 [shape = 's32[1]{0}', space=sflag, size = 0x4, scoped, tag = 'scoped memory for tpu_custom_call.1']
    #allocation4 [shape = 's32[1]{0}', space=sflag, size = 0x4, scoped, tag = 'scoped memory for tpu_custom_call.1']
    #allocation5 [shape = 'u8[16384]{0}', space=vmem, size = 0x4000, scoped, tag = 'input window, operand 1, single buffered']
    #allocation6 [shape = 's32[1]{0}', space=sflag, size = 0x4, scoped, tag = 'scoped memory for tpu_custom_call.1']
    #allocation7 [shape = 'u8[36864]{0}', space=vmem, size = 0x9000, scoped, tag = 'input window, operand 3, single buffered']
    #allocation8 [shape = 'u8[1024]{0}', space=vmem, size = 0x400, scoped, tag = 'output window, operand 0, single buffered']
    %10 = vsyncpa [#allocation3], 0
    %11 = vsyncpa [#allocation6], 0
    %12 = vsyncpa [#allocation4], 0
    // Predicated region
    $region2: #{tpu_custom_call.1} parent=1 // pred_check
      _
    $region3: #{tpu_custom_call.1} parent=1 // pred_check_branch
      %14 = sbr.rel (0) target = $region5
    $region4: #{tpu_custom_call.1} parent=1 // pred_region
      %s16 = ssub.s32 1024, 1024
      %17 = vsyncadd [#allocation3], %s16
      %s18 = sshll.u32 [#allocation2], 4
      %s19 = int_to_ptr.vmem [resolvable:$true] %s18
      %24 = dma.hbm_to_vmem [thread:$0]  %s0, 1024, %s19, [#allocation3], 128, 128, 8
    $region5: #{tpu_custom_call.1} parent=1 // pred_fallthru
      _
    // Predicated region
    $region6: #{tpu_custom_call.1} parent=1 // pred_check
      _
    $region7: #{tpu_custom_call.1} parent=1 // pred_check_branch
      %26 = sbr.rel (0) target = $region9
    $region8: #{tpu_custom_call.1} parent=1 // pred_region
      %s28 = ssub.s32 512, 512
      %29 = vsyncadd [#allocation6], %s28
      %s30 = sshll.u32 [#allocation5], 4
      %s31 = int_to_ptr.vmem [resolvable:$true] %s30
      %36 = dma.hbm_to_vmem [thread:$0]  %s1, 512, %s31, [#allocation6], 128, 128, 8
    $region9: #{tpu_custom_call.1} parent=1 // pred_fallthru
      _
    // Predicated region
    $region10: #{tpu_custom_call.1} parent=1 // pred_check
      _
    $region11: #{tpu_custom_call.1} parent=1 // pred_check_branch
      %38 = sbr.rel (0) target = $region13
    $region12: #{tpu_custom_call.1} parent=1 // pred_region
      _
    $region13: #{tpu_custom_call.1} parent=1 // pred_fallthru
      _
    // Predicated region
    $region14: #{tpu_custom_call.1} parent=1 // pred_check
      _
    $region15: #{tpu_custom_call.1} parent=1 // pred_check_branch
      %40 = sbr.rel (0) target = $region17
    $region16: #{tpu_custom_call.1} parent=1 // pred_region
      %s42 = ssub.s32 1152, 1152
      %43 = vsyncadd [#allocation6], %s42
      %s44 = sshll.u32 [#allocation7], 4
      %s45 = int_to_ptr.vmem [resolvable:$true] %s44
      %50 = dma.hbm_to_vmem [thread:$0]  %s3, 1152, %s45, [#allocation6], 128, 128, 8
    $region17: #{tpu_custom_call.1} parent=1 // pred_fallthru
      _
    // Predicated region
    $region18: #{tpu_custom_call.1} parent=1 // pred_check
      _
    $region19: #{tpu_custom_call.1} parent=1 // pred_check_branch
      %52 = sbr.rel (0) target = $region21
    $region20: #{tpu_custom_call.1} parent=1 // pred_region
      _
    $region21: #{tpu_custom_call.1} parent=1 // pred_fallthru
      _
    // Predicated region
    $region22: #{tpu_custom_call.1} parent=1 // pred_check
      _
    $region23: #{tpu_custom_call.1} parent=1 // pred_check_branch
      %54 = sbr.rel (0) target = $region25
    $region24: #{tpu_custom_call.1} parent=1 // pred_region
      %55 = dma.done [#allocation3], 1024
    $region25: #{tpu_custom_call.1} parent=1 // pred_fallthru
      _
    // Predicated region
    $region26: #{tpu_custom_call.1} parent=1 // pred_check
      _
    $region27: #{tpu_custom_call.1} parent=1 // pred_check_branch
      %57 = sbr.rel (0) target = $region29
    $region28: #{tpu_custom_call.1} parent=1 // pred_region
      %58 = dma.done [#allocation6], 512
    $region29: #{tpu_custom_call.1} parent=1 // pred_fallthru
      _
    // Predicated region
    $region30: #{tpu_custom_call.1} parent=1 // pred_check
      _
    $region31: #{tpu_custom_call.1} parent=1 // pred_check_branch
      %60 = sbr.rel (0) target = $region33
    $region32: #{tpu_custom_call.1} parent=1 // pred_region
      %61 = dma.done [#allocation6], 1152
    $region33: #{tpu_custom_call.1} parent=1 // pred_fallthru
      _
    %v62 = vld [vmem:[#allocation2] sm:$0xff]
    %v63 = vld [vmem:[#allocation2 + $0x8] sm:$0xff]
    %v64 = vld [vmem:[#allocation2 + $0x10] sm:$0xff]
    %v65 = vld [vmem:[#allocation2 + $0x18] sm:$0xff]
    %v66 = vld [vmem:[#allocation2 + $0x20] sm:$0xff]
    %v67 = vld [vmem:[#allocation2 + $0x28] sm:$0xff]
    %v68 = vld [vmem:[#allocation2 + $0x30] sm:$0xff]
    %v69 = vld [vmem:[#allocation2 + $0x38] sm:$0xff]
    %vm70 = vcmask 261120
    %v71 = vsel %vm70, %v62, 0.0
    %72 = vadd.xlane.f32.xlu0 %v71
    %v73 = vpop.xlane.xlu0 %72
    %v74 = vsel %vm70, %v63, 0.0
    %75 = vadd.xlane.f32.xlu0 %v74
    %v76 = vpop.xlane.xlu0 %75
    %v77 = vsel %vm70, %v64, 0.0
    %78 = vadd.xlane.f32.xlu0 %v77
    %v79 = vpop.xlane.xlu0 %78
    %v80 = vsel %vm70, %v65, 0.0
    %81 = vadd.xlane.f32.xlu0 %v80
    %v82 = vpop.xlane.xlu0 %81
    %v83 = vsel %vm70, %v66, 0.0
    %84 = vadd.xlane.f32.xlu0 %v83
    %v85 = vpop.xlane.xlu0 %84
    %v86 = vsel %vm70, %v67, 0.0
    %87 = vadd.xlane.f32.xlu0 %v86
    %v88 = vpop.xlane.xlu0 %87
    %v89 = vsel %vm70, %v68, 0.0
    %90 = vadd.xlane.f32.xlu0 %v89
    %v91 = vpop.xlane.xlu0 %90
    %v92 = vsel %vm70, %v69, 0.0
    %93 = vadd.xlane.f32.xlu0 %v92
    %v94 = vpop.xlane.xlu0 %93
    %v95 = vrcp.pop 32.0
    %v96 = vmul.f32 %v73, %v95
    %v97 = vmul.f32 %v76, %v95
    %v98 = vmul.f32 %v79, %v95
    %v99 = vmul.f32 %v82, %v95
    %v100 = vmul.f32 %v85, %v95
    %v101 = vmul.f32 %v88, %v95
    %v102 = vmul.f32 %v91, %v95
    %v103 = vmul.f32 %v94, %v95
    %v104 = vld [vmem:[#allocation5] sm:$0xff]
    %v105 = vld [vmem:[#allocation5 + $0x8] sm:$0xff]
    %v106 = vld [vmem:[#allocation5 + $0x10] sm:$0xff]
    %v107 = vld [vmem:[#allocation5 + $0x18] sm:$0xff]
    %vm108 = vcmask 523264
    %v109 = vsel %vm108, %v104, 0.0
    %110 = vadd.xlane.f32.xlu0 %v109
    %v111 = vpop.xlane.xlu0 %110
    %v112 = vsel %vm108, %v105, 0.0
    %113 = vadd.xlane.f32.xlu0 %v112
    %v114 = vpop.xlane.xlu0 %113
    %v115 = vsel %vm108, %v106, 0.0
    %116 = vadd.xlane.f32.xlu0 %v115
    %v117 = vpop.xlane.xlu0 %116
    %v118 = vsel %vm108, %v107, 0.0
    %119 = vadd.xlane.f32.xlu0 %v118
    %v120 = vpop.xlane.xlu0 %119
    %v121 = vrcp.pop 64.0
    %v122 = vmul.f32 %v111, %v121
    %v123 = vmul.f32 %v114, %v121
    %v124 = vmul.f32 %v117, %v121
    %v125 = vmul.f32 %v120, %v121
    %v126 = vld [vmem:[%s2] sm:$0x3]
    %v135 = vlaneseq
    %v136 = vand.u32 %v135, 127
    %v137 = vlaneseq
    %v138 = vshrl.u32 %v137, 7
    %v139 = vsub.s32 %v136, %v138
    %v140 = vrot.slane %v96, %v139
    %v141 = vadd.s32 %v136, 4294967288
    %v142 = vlaneseq
    %v143 = vshrl.u32 %v142, 7
    %v144 = vsub.s32 %v141, %v143
    %v145 = vrot.slane %v97, %v144
    %vm146 = vcmask 130112
    %v147 = vsel %vm146, %v145, %v140
    %v148 = vadd.s32 %v136, 4294967280
    %v149 = vlaneseq
    %v150 = vshrl.u32 %v149, 7
    %v151 = vsub.s32 %v148, %v150
    %v152 = vrot.slane %v98, %v151
    %vm153 = vcmask 195712
    %v154 = vsel %vm153, %v152, %v147
    %v155 = vadd.s32 %v136, 4294967272
    %v156 = vlaneseq
    %v157 = vshrl.u32 %v156, 7
    %v158 = vsub.s32 %v155, %v157
    %v159 = vrot.slane %v99, %v158
    %vm160 = vcmask 261312
    %v161 = vsel %vm160, %v159, %v154
    %v162 = vlaneseq
    %v163 = vshrl.u32 %v162, 7
    %v164 = vsub.s32 %v136, %v163
    %v165 = vrot.slane %v100, %v164
    %v166 = vlaneseq
    %v167 = vshrl.u32 %v166, 7
    %v168 = vsub.s32 %v141, %v167
    %v169 = vrot.slane %v101, %v168
    %v170 = vsel %vm146, %v169, %v165
    %v171 = vlaneseq
    %v172 = vshrl.u32 %v171, 7
    %v173 = vsub.s32 %v148, %v172
    %v174 = vrot.slane %v102, %v173
    %v175 = vsel %vm153, %v174, %v170
    %v176 = vlaneseq
    %v177 = vshrl.u32 %v176, 7
    %v178 = vsub.s32 %v155, %v177
    %v179 = vrot.slane %v103, %v178
    %v180 = vsel %vm160, %v179, %v175
    %vm181 = vcmask 1041409
    %v182 = vsel %vm181, %v180, %v161
    %v188 = vadd.s32 %v136, 4294967264
    %v189 = vlaneseq
    %v190 = vshrl.u32 %v189, 7
    %v191 = vsub.s32 %v188, %v190
    %v192 = vrot.slane %v122, %v191
    %v193 = vadd.s32 %v136, 4294967256
    %v194 = vlaneseq
    %v195 = vshrl.u32 %v194, 7
    %v196 = vsub.s32 %v193, %v195
    %v197 = vrot.slane %v123, %v196
    %vm198 = vcmask 392512
    %v199 = vsel %vm198, %v197, %v192
    %v200 = vlaneseq
    %v201 = vshrl.u32 %v200, 7
    %v202 = vsub.s32 %v188, %v201
    %v203 = vrot.slane %v124, %v202
    %v204 = vlaneseq
    %v205 = vshrl.u32 %v204, 7
    %v206 = vsub.s32 %v193, %v205
    %v207 = vrot.slane %v125, %v206
    %v208 = vsel %vm198, %v207, %v203
    %v209 = vsel %vm181, %v208, %v199
    %212 = vrot.lane.b32.xlu0 %v126, 48
    %v213 = vpop.permute.xlu0 %212
    %v215 = vsel %vm70, %v182, %v209
    %vm216 = vcmask 392192
    %v217 = vsel %vm216, %v215, %v213
    %v218 = vld [vmem:[#allocation7] sm:$0xff]
    %v219 = vld [vmem:[#allocation7 + $0x8] sm:$0xff]
    %v220 = vld [vmem:[#allocation7 + $0x10] sm:$0xff]
    %v221 = vld [vmem:[#allocation7 + $0x18] sm:$0xff]
    %v222 = vld [vmem:[#allocation7 + $0x20] sm:$0xff]
    %v223 = vld [vmem:[#allocation7 + $0x28] sm:$0xff]
    %v224 = vld [vmem:[#allocation7 + $0x30] sm:$0xff]
    %v225 = vld [vmem:[#allocation7 + $0x38] sm:$0xff]
    %v226 = vld [vmem:[#allocation7 + $0x40] sm:$0xff]
    %v227 = vld [vmem:[%s4] sm:$0x1]
    %v229 = vlaneseq
    %v230 = vshrl.u32 %v229, 7
    %v231 = vsub.s32 0, %v230
    %v232 = vrot.slane %v227, %v231
    %vm234 = vcmask 588800
    %v236 = vsel %vm234, %v217, 0
    %238 = vmatprep.subr.mxu0 0.0
    %239 = vmatpush1.msra.mxu0 0.0
    %240 = vmatprep.subr.mxu0 0.0
    %241 = vmatpush1.msra.mxu0 0.0
    %242 = vmatprep.subr.mxu0 0.0
    %243 = vmatpush1.msra.mxu0 0.0
    %244 = vmatprep.subr.mxu0 0.0
    %245 = vmatpush1.msra.mxu0 0.0
    %246 = vmatprep.subr.mxu0 0.0
    %247 = vmatpush1.msra.mxu0 0.0
    %248 = vmatprep.subr.mxu0 0.0
    %249 = vmatpush1.msra.mxu0 0.0
    %250 = vmatprep.subr.mxu0 0.0
    %251 = vmatpush1.msra.mxu0 0.0
    %252 = vmatprep.subr.mxu0 0.0
    %253 = vmatpush1.msra.mxu0 %v226
    %254 = vmatprep.subr.mxu0 0.0
    %255 = vmatpush1.msra.mxu0 %v225
    %256 = vmatprep.subr.mxu0 0.0
    %257 = vmatpush1.msra.mxu0 %v224
    %258 = vmatprep.subr.mxu0 0.0
    %259 = vmatpush1.msra.mxu0 %v223
    %260 = vmatprep.subr.mxu0 0.0
    %261 = vmatpush1.msra.mxu0 %v222
    %262 = vmatprep.subr.mxu0 0.0
    %263 = vmatpush1.msra.mxu0 %v221
    %264 = vmatprep.subr.mxu0 0.0
    %265 = vmatpush1.msra.mxu0 %v220
    %266 = vmatprep.subr.mxu0 0.0
    %267 = vmatpush1.msra.mxu0 %v219
    %268 = vmatprep.subr.mxu0 0.0
    %269 = vmatpush1.msra.mxu0 %v218
    %270 = vmatprep.subr.mxu0 0.0
    %271 = vmatpush2.msra.mxu0 0.0
    %272 = vmatprep.subr.mxu0 0.0
    %273 = vmatpush2.msra.mxu0 0.0
    %274 = vmatprep.subr.mxu0 0.0
    %275 = vmatpush2.msra.mxu0 0.0
    %276 = vmatprep.subr.mxu0 0.0
    %277 = vmatpush2.msra.mxu0 0.0
    %278 = vmatprep.subr.mxu0 0.0
    %279 = vmatpush2.msra.mxu0 0.0
    %280 = vmatprep.subr.mxu0 0.0
    %281 = vmatpush2.msra.mxu0 0.0
    %282 = vmatprep.subr.mxu0 0.0
    %283 = vmatpush2.msra.mxu0 0.0
    %284 = vmatprep.subr.mxu0 0.0
    %285 = vmatpush2.msra.mxu0 0.0
    %286 = vmatprep.subr.mxu0 0.0
    %287 = vmatpush2.msra.mxu0 0.0
    %288 = vmatprep.subr.mxu0 0.0
    %289 = vmatpush2.msra.mxu0 0.0
    %290 = vmatprep.subr.mxu0 0.0
    %291 = vmatpush2.msra.mxu0 0.0
    %292 = vmatprep.subr.mxu0 0.0
    %293 = vmatpush2.msra.mxu0 0.0
    %294 = vmatprep.subr.mxu0 0.0
    %295 = vmatpush2.msra.mxu0 0.0
    %296 = vmatprep.subr.mxu0 0.0
    %297 = vmatpush2.msra.mxu0 0.0
    %298 = vmatprep.subr.mxu0 0.0
    %299 = vmatpush2.msra.mxu0 0.0
    %300 = vmatprep.subr.mxu0 0.0
    %301 = vmatpush2.msra.mxu0 0.0
    %302 = vmatprep.mubr.f32.mxu0 0.0
    %303 = vmatmul.mubr.f32.gmra.mxu0 %v236
    %v304 = vpop.f32.mrf.mxu0
    %v305 = vadd.f32 %v232, %v304
    %v306 = vpop.f32.mrf.mxu0
    %307 = vdwg.mxu0
    %vm308 = vcmp.ge.s32.totalorder %v136, 0
    %vm309 = vcmp.lt.s32.totalorder %v136, 5
    %vm310 = vmand %vm308, %vm309
    %v311 = vsel %vm310, %v305, -inf
    %vm312 = vcmask 1041408
    %v313 = vsel %vm312, %v311, -inf
    %314 = vmax.xlane.f32.xlu0 %v313
    %v315 = vpop.xlane.xlu0 %314
    %v316 = vsub.f32 %v305, %v315
    %v317 = vmul.f32 %v316, 1.442695
    %v318 = vpow.pop %v317
    %v319 = vsel %vm310, %v318, 0.0
    %v320 = vsel %vm312, %v319, 0.0
    %321 = vadd.xlane.f32.xlu0 %v320
    %v322 = vpop.xlane.xlu0 %321
    %v323 = vrcp.pop %v322
    %v324 = vmul.f32 %v322, %v323
    %v325 = vsub.f32 2.0, %v324
    %v326 = vmul.f32 %v323, %v325
    %v327 = vmul.f32 %v319, %v326
    %v328 = vadd.f32 %v327, 0.0
    %vm329 = vcmp.ge.s32.totalorder %v136, 5
    %vm330 = vcmp.lt.s32.totalorder %v136, 8
    %vm331 = vmand %vm329, %vm330
    %v332 = vsel %vm331, %v305, -inf
    %v333 = vsel %vm312, %v332, -inf
    %334 = vmax.xlane.f32.xlu0 %v333
    %v335 = vpop.xlane.xlu0 %334
    %v336 = vsub.f32 %v305, %v335
    %v337 = vmul.f32 %v336, 1.442695
    %v338 = vpow.pop %v337
    %v339 = vsel %vm331, %v338, 0.0
    %v340 = vsel %vm312, %v339, 0.0
    %341 = vadd.xlane.f32.xlu0 %v340
    %v342 = vpop.xlane.xlu0 %341
    %v343 = vrcp.pop %v342
    %v344 = vmul.f32 %v342, %v343
    %v345 = vsub.f32 2.0, %v344
    %v346 = vmul.f32 %v343, %v345
    %v347 = vmul.f32 %v339, %v346
    %v348 = vadd.f32 %v328, %v347
    %349 = vst [vmem:[#allocation8] sm:$0x3] %v348
    // Predicated region
    $region34: #{tpu_custom_call.1} parent=1 // pred_check
      _
    $region35: #{tpu_custom_call.1} parent=1 // pred_check_branch
      %351 = sbr.rel (0) target = $region37
    $region36: #{tpu_custom_call.1} parent=1 // pred_region
      %s353 = ssub.s32 32, 32
      %354 = vsyncadd [#allocation4], %s353
      %s356 = sshll.u32 [#allocation8], 4
      %s357 = int_to_ptr.vmem [resolvable:$true] %s356
      %359 = dma.vmem_to_hbm [thread:$0]  %s357, 32, %s5, [#allocation4]
    $region37: #{tpu_custom_call.1} parent=1 // pred_fallthru
      _
    // Predicated region
    $region38: #{tpu_custom_call.1} parent=1 // pred_check
      _
    $region39: #{tpu_custom_call.1} parent=1 // pred_check_branch
      %361 = sbr.rel (0) target = $region41
    $region40: #{tpu_custom_call.1} parent=1 // pred_region
      %362 = dma.done [#allocation4], 32
    $region41: #{tpu_custom_call.1} parent=1 // pred_fallthru
      _
    %363 = vsyncpa [#allocation3], 1
    %364 = vsyncpa [#allocation6], 1
    %365 = vsyncpa [#allocation4], 1

</llo_original>
